<compile_context>
chip_gen: v7x
topology: tpu7x:2x2x1
jax: 0.10.0
libtpu: 0.0.40
codegen_flags: <defaults>
</compile_context>

<pallas_src>
import jax
import jax.numpy as jnp
from jax.experimental import pallas as pl
from jax.experimental.pallas import tpu as pltpu


def attn_kernel(x_ref, scale_ref, w_ref, b_ref, wo_ref, out_ref):
    f32 = jnp.float32
    bf16 = jnp.bfloat16

    _, N, _I = x_ref.shape          # (3, N, I)
    H = scale_ref.shape[0]          # (H, N, N)
    HD = w_ref.shape[2]             # (3, I, H*D)
    D = HD // H
    M = wo_ref.shape[1]             # (H*D, M)

    # ---- fused input projections: 3 MXU pushes, 64-lane outputs ----
    x = x_ref[...]                  # (3, N, I)   bf16
    w = w_ref[...]                  # (3, I, HD)  bf16
    b = b_ref[...]                  # (4, 1, HD)  f32  (rows 0..2 = bq/bk/bv, row 3 = bo padded)
    qkv = jnp.einsum('bni,bio->bno', x, w,
                     preferred_element_type=f32) + b[0:3]        # (3, N, HD) f32

    # ---- head-split views only where the score/context matmuls need them ----
    def split_heads(t):             # (N, HD) f32 -> (H, N, D) bf16
        t = t.astype(bf16)          # lane-dense cast on the 64-lane slab
        return jnp.stack([t[:, h * D:(h + 1) * D] for h in range(H)], axis=0)

    q_h = split_heads(qkv[0])
    k_h = split_heads(qkv[1])
    v_h = split_heads(qkv[2])

    # ---- scores: batched contraction over D, RHS consumed transposed ----
    s = jnp.einsum('hnd,hmd->hnm', q_h, k_h,
                   preferred_element_type=f32)                   # (H, N, N) f32

    # qk.div(inv_scale_factor): exact reciprocal precomputed in the wrapper
    s = s * scale_ref[...]

    # softmax over last dim (f32); denominator reciprocal on the EUP
    s = s - jnp.max(s, axis=-1, keepdims=True)
    p = jnp.exp(s)
    p = p * pl.reciprocal(jnp.sum(p, axis=-1, keepdims=True), approx=True)

    # TODO(synk): torch.nn.Dropout treated as inference-mode identity
    # (dropout_p is undefined in the reference module's globals anyway).

    # ---- context, merged back to a lane-dense (N, H*D) slab ----
    o = jnp.einsum('hnm,hmd->hnd', p.astype(bf16), v_h,
                   preferred_element_type=f32)                   # (H, N, D) f32
    o_flat = jnp.concatenate([o[h] for h in range(H)], axis=-1)  # (N, HD) f32

    # ---- single fused output projection ----
    out = jnp.dot(o_flat.astype(bf16), wo_ref[...],
                  preferred_element_type=f32) + b[3, :, :M]      # (N, M) f32
    out_ref[...] = out.astype(out_ref.dtype)


def mha_forward(query, key, value, inv_scale, params, *, num_head, d_model):
    wq, bq, wk, bk, wv, bv, wo, bo = params
    H, D = num_head, d_model
    HD = H * D
    M = wo.shape[1]
    N = query.shape[0]

    # --- one-time wrapper-side packing / dtype prep (outside the kernel) ---
    # Pad q/k/v input features to a common width so they stack into one array
    # (zero-padding the matching weight rows keeps x @ W exact).
    I = max(query.shape[1], key.shape[1], value.shape[1])

    def pad_x(a):
        return jnp.pad(a, ((0, 0), (0, I - a.shape[1])))

    def pad_w(wm):
        return jnp.pad(wm, ((0, I - wm.shape[0]), (0, 0)))

    x_qkv = jnp.stack([pad_x(query), pad_x(key), pad_x(value)]).astype(jnp.bfloat16)  # (3, N, I)
    w_qkv = jnp.stack([pad_w(wq), pad_w(wk), pad_w(wv)]).astype(jnp.bfloat16)         # (3, I, HD)
    bo_pad = jnp.pad(bo, ((0, 0), (0, HD - M)))
    b_all = jnp.stack([bq, bk, bv, bo_pad]).astype(jnp.float32)                        # (4, 1, HD)
    wo_bf = wo.astype(jnp.bfloat16)                                                    # (HD, M)
    scale = (1.0 / inv_scale).astype(jnp.float32)   # exact reciprocal, done by XLA    # (H, N, N)

    n_inputs = 5
    return pl.pallas_call(
        attn_kernel,
        out_shape=jax.ShapeDtypeStruct((N, M), jnp.float32),
        in_specs=[pl.BlockSpec(memory_space=pltpu.MemorySpace.VMEM)] * n_inputs,
        out_specs=pl.BlockSpec(memory_space=pltpu.MemorySpace.VMEM),
    )(x_qkv, scale, w_qkv, b_all, wo_bf)


def ref_forward(query, key, value, inv_scale, params, *, num_head, d_model):
    wq, bq, wk, bk, wv, bv, wo, bo = params
    q = (query @ wq + bq).reshape(-1, num_head, d_model).transpose(1, 0, 2)
    k = (key @ wk + bk).reshape(-1, num_head, d_model).transpose(1, 0, 2)
    v = (value @ wv + bv).reshape(-1, num_head, d_model).transpose(1, 0, 2)
    qk = jnp.einsum('hnd,hmd->hnm', q, k)
    scaled = qk / inv_scale
    p = jax.nn.softmax(scaled, axis=-1)
    o = jnp.einsum('hnm,hmd->hnd', p, v).transpose(1, 0, 2)
    o = o.reshape(-1, num_head * d_model)
    return o @ wo + bo


if __name__ == "__main__":
    # small, module-consistent shapes
    N = 8              # number of tokens (query/key/value rows)
    query_size = 32
    key_size = 32
    value_size = 32
    d_model = 16
    num_head = 4

    key0 = jax.random.PRNGKey(0)
    ks = jax.random.split(key0, 16)

    # deterministic parameter init (Linear weights stored as (in, out))
    wq = jax.random.normal(ks[0], (query_size, d_model * num_head), jnp.float32) * 0.1
    bq = jax.random.normal(ks[1], (1, d_model * num_head), jnp.float32) * 0.1
    wk = jax.random.normal(ks[2], (key_size, d_model * num_head), jnp.float32) * 0.1
    bk = jax.random.normal(ks[3], (1, d_model * num_head), jnp.float32) * 0.1
    wv = jax.random.normal(ks[4], (value_size, d_model * num_head), jnp.float32) * 0.1
    bv = jax.random.normal(ks[5], (1, d_model * num_head), jnp.float32) * 0.1
    wo = jax.random.normal(ks[6], (d_model * num_head, d_model), jnp.float32) * 0.1
    bo = jax.random.normal(ks[7], (1, d_model), jnp.float32) * 0.1
    params = (wq, bq, wk, bk, wv, bv, wo, bo)

    # example inputs
    query = jax.random.normal(ks[8], (N, query_size), jnp.float32)
    key_in = jax.random.normal(ks[9], (N, key_size), jnp.float32)
    value = jax.random.normal(ks[10], (N, value_size), jnp.float32)
    inv_scale = jax.random.uniform(ks[11], (num_head, N, N), jnp.float32,
                                   minval=0.5, maxval=2.0)

    out = mha_forward(query, key_in, value, inv_scale, params,
                      num_head=num_head, d_model=d_model)
    out = jax.block_until_ready(out)

    ref = ref_forward(query, key_in, value, inv_scale, params,
                      num_head=num_head, d_model=d_model)

    assert out.shape == (N, d_model)
    assert jnp.allclose(out, ref, rtol=1e-2, atol=1e-2), (
        f"max abs diff {jnp.max(jnp.abs(out - ref))}")

    print("KERNEL_OK")
</pallas_src>

<mosaic_0001>
module attributes {stable_mosaic.version = 11 : i64} {
  func.func @attn_kernel(%arg0: memref<3x8x32xbf16, #tpu.memory_space<vmem>>, %arg1: memref<4x8x8xf32, #tpu.memory_space<vmem>>, %arg2: memref<3x32x64xbf16, #tpu.memory_space<vmem>>, %arg3: memref<4x1x64xf32, #tpu.memory_space<vmem>>, %arg4: memref<64x16xbf16, #tpu.memory_space<vmem>>, %arg5: memref<8x16xf32, #tpu.memory_space<vmem>>) attributes {dimension_semantics = [], scalar_prefetch = 0 : i64, scratch_operands = 0 : i64, tpu.core_type = #tpu.core_type<tc>} {
    %c0 = arith.constant 0 : index
    %c0_0 = arith.constant 0 : index
    %c0_1 = arith.constant 0 : index
    %0 = vector.load %arg0[%c0, %c0_0, %c0_1] : memref<3x8x32xbf16, #tpu.memory_space<vmem>>, vector<3x8x32xbf16>
    %c0_2 = arith.constant 0 : index
    %c0_3 = arith.constant 0 : index
    %c0_4 = arith.constant 0 : index
    %1 = vector.load %arg2[%c0_2, %c0_3, %c0_4] : memref<3x32x64xbf16, #tpu.memory_space<vmem>>, vector<3x32x64xbf16>
    %c0_5 = arith.constant 0 : index
    %c0_6 = arith.constant 0 : index
    %c0_7 = arith.constant 0 : index
    %2 = vector.load %arg3[%c0_5, %c0_6, %c0_7] : memref<4x1x64xf32, #tpu.memory_space<vmem>>, vector<4x1x64xf32>
    "tpu.trace_start"() <{level = 10 : i32, message = "bni,bio->bno"}> : () -> ()
    %cst = arith.constant dense<0.000000e+00> : vector<3x8x64xf32>
    %3 = tpu.matmul %0, %1, %cst {dimension_numbers = #tpu.dot_dimension_numbers<[2], [1], [1], [2], [0, 0, 0, 1, 1, 2], [0], [0]>} : vector<3x8x32xbf16>, vector<3x32x64xbf16>, vector<3x8x64xf32> -> vector<3x8x64xf32>
    "tpu.trace_stop"() : () -> ()
    %4 = vector.extract_strided_slice %2 {offsets = [0, 0, 0], sizes = [3, 1, 64], strides = [1, 1, 1]} : vector<4x1x64xf32> to vector<3x1x64xf32>
    %5 = vector.broadcast %4 : vector<3x1x64xf32> to vector<3x8x64xf32>
    %6 = arith.addf %3, %5 : vector<3x8x64xf32>
    %7 = vector.extract_strided_slice %6 {offsets = [0, 0, 0], sizes = [1, 8, 64], strides = [1, 1, 1]} : vector<3x8x64xf32> to vector<1x8x64xf32>
    %8 = vector.shape_cast %7 : vector<1x8x64xf32> to vector<8x64xf32>
    %9 = arith.truncf %8 : vector<8x64xf32> to vector<8x64xbf16>
    %10 = vector.extract_strided_slice %9 {offsets = [0, 0], sizes = [8, 16], strides = [1, 1]} : vector<8x64xbf16> to vector<8x16xbf16>
    %11 = vector.extract_strided_slice %9 {offsets = [0, 16], sizes = [8, 16], strides = [1, 1]} : vector<8x64xbf16> to vector<8x16xbf16>
    %12 = vector.extract_strided_slice %9 {offsets = [0, 32], sizes = [8, 16], strides = [1, 1]} : vector<8x64xbf16> to vector<8x16xbf16>
    %13 = vector.extract_strided_slice %9 {offsets = [0, 48], sizes = [8, 16], strides = [1, 1]} : vector<8x64xbf16> to vector<8x16xbf16>
    %14 = vector.shape_cast %10 : vector<8x16xbf16> to vector<1x8x16xbf16>
    %15 = vector.shape_cast %11 : vector<8x16xbf16> to vector<1x8x16xbf16>
    %16 = vector.shape_cast %12 : vector<8x16xbf16> to vector<1x8x16xbf16>
    %17 = vector.shape_cast %13 : vector<8x16xbf16> to vector<1x8x16xbf16>
    %18 = tpu.concatenate %14, %15, %16, %17 in 0 : vector<1x8x16xbf16>, vector<1x8x16xbf16>, vector<1x8x16xbf16>, vector<1x8x16xbf16> -> vector<4x8x16xbf16>
    %19 = vector.extract_strided_slice %6 {offsets = [1, 0, 0], sizes = [1, 8, 64], strides = [1, 1, 1]} : vector<3x8x64xf32> to vector<1x8x64xf32>
    %20 = vector.shape_cast %19 : vector<1x8x64xf32> to vector<8x64xf32>
    %21 = arith.truncf %20 : vector<8x64xf32> to vector<8x64xbf16>
    %22 = vector.extract_strided_slice %21 {offsets = [0, 0], sizes = [8, 16], strides = [1, 1]} : vector<8x64xbf16> to vector<8x16xbf16>
    %23 = vector.extract_strided_slice %21 {offsets = [0, 16], sizes = [8, 16], strides = [1, 1]} : vector<8x64xbf16> to vector<8x16xbf16>
    %24 = vector.extract_strided_slice %21 {offsets = [0, 32], sizes = [8, 16], strides = [1, 1]} : vector<8x64xbf16> to vector<8x16xbf16>
    %25 = vector.extract_strided_slice %21 {offsets = [0, 48], sizes = [8, 16], strides = [1, 1]} : vector<8x64xbf16> to vector<8x16xbf16>
    %26 = vector.shape_cast %22 : vector<8x16xbf16> to vector<1x8x16xbf16>
    %27 = vector.shape_cast %23 : vector<8x16xbf16> to vector<1x8x16xbf16>
    %28 = vector.shape_cast %24 : vector<8x16xbf16> to vector<1x8x16xbf16>
    %29 = vector.shape_cast %25 : vector<8x16xbf16> to vector<1x8x16xbf16>
    %30 = tpu.concatenate %26, %27, %28, %29 in 0 : vector<1x8x16xbf16>, vector<1x8x16xbf16>, vector<1x8x16xbf16>, vector<1x8x16xbf16> -> vector<4x8x16xbf16>
    %31 = vector.extract_strided_slice %6 {offsets = [2, 0, 0], sizes = [1, 8, 64], strides = [1, 1, 1]} : vector<3x8x64xf32> to vector<1x8x64xf32>
    %32 = vector.shape_cast %31 : vector<1x8x64xf32> to vector<8x64xf32>
    %33 = arith.truncf %32 : vector<8x64xf32> to vector<8x64xbf16>
    %34 = vector.extract_strided_slice %33 {offsets = [0, 0], sizes = [8, 16], strides = [1, 1]} : vector<8x64xbf16> to vector<8x16xbf16>
    %35 = vector.extract_strided_slice %33 {offsets = [0, 16], sizes = [8, 16], strides = [1, 1]} : vector<8x64xbf16> to vector<8x16xbf16>
    %36 = vector.extract_strided_slice %33 {offsets = [0, 32], sizes = [8, 16], strides = [1, 1]} : vector<8x64xbf16> to vector<8x16xbf16>
    %37 = vector.extract_strided_slice %33 {offsets = [0, 48], sizes = [8, 16], strides = [1, 1]} : vector<8x64xbf16> to vector<8x16xbf16>
    %38 = vector.shape_cast %34 : vector<8x16xbf16> to vector<1x8x16xbf16>
    %39 = vector.shape_cast %35 : vector<8x16xbf16> to vector<1x8x16xbf16>
    %40 = vector.shape_cast %36 : vector<8x16xbf16> to vector<1x8x16xbf16>
    %41 = vector.shape_cast %37 : vector<8x16xbf16> to vector<1x8x16xbf16>
    %42 = tpu.concatenate %38, %39, %40, %41 in 0 : vector<1x8x16xbf16>, vector<1x8x16xbf16>, vector<1x8x16xbf16>, vector<1x8x16xbf16> -> vector<4x8x16xbf16>
    "tpu.trace_start"() <{level = 10 : i32, message = "hnd,hmd->hnm"}> : () -> ()
    %cst_8 = arith.constant dense<0.000000e+00> : vector<4x8x8xf32>
    %43 = tpu.matmul %18, %30, %cst_8 {dimension_numbers = #tpu.dot_dimension_numbers<[2], [2], [1], [1], [0, 0, 0, 1, 1, 1], [0], [0]>} : vector<4x8x16xbf16>, vector<4x8x16xbf16>, vector<4x8x8xf32> -> vector<4x8x8xf32>
    "tpu.trace_stop"() : () -> ()
    %c0_9 = arith.constant 0 : index
    %c0_10 = arith.constant 0 : index
    %c0_11 = arith.constant 0 : index
    %44 = vector.load %arg1[%c0_9, %c0_10, %c0_11] : memref<4x8x8xf32, #tpu.memory_space<vmem>>, vector<4x8x8xf32>
    %45 = arith.mulf %43, %44 : vector<4x8x8xf32>
    %cst_12 = arith.constant dense<0xFF800000> : vector<4x8xf32>
    %46 = vector.multi_reduction <maximumf>, %45, %cst_12 [2] : vector<4x8x8xf32> to vector<4x8xf32>
    %47 = vector.shape_cast %46 : vector<4x8xf32> to vector<4x8x1xf32>
    %48 = vector.broadcast %47 : vector<4x8x1xf32> to vector<4x8x8xf32>
    %49 = arith.subf %45, %48 : vector<4x8x8xf32>
    %50 = math.exp %49 : vector<4x8x8xf32>
    %cst_13 = arith.constant dense<0.000000e+00> : vector<4x8xf32>
    %51 = vector.multi_reduction <add>, %50, %cst_13 [2] : vector<4x8x8xf32> to vector<4x8xf32>
    %52 = vector.shape_cast %51 : vector<4x8xf32> to vector<4x8x1xf32>
    %53 = tpu.reciprocal %52 {approx = true} : vector<4x8x1xf32> -> vector<4x8x1xf32>
    %54 = vector.broadcast %53 : vector<4x8x1xf32> to vector<4x8x8xf32>
    %55 = arith.mulf %50, %54 : vector<4x8x8xf32>
    %56 = arith.truncf %55 : vector<4x8x8xf32> to vector<4x8x8xbf16>
    "tpu.trace_start"() <{level = 10 : i32, message = "hnm,hmd->hnd"}> : () -> ()
    %cst_14 = arith.constant dense<0.000000e+00> : vector<4x8x16xf32>
    %57 = tpu.matmul %56, %42, %cst_14 {dimension_numbers = #tpu.dot_dimension_numbers<[2], [1], [1], [2], [0, 0, 0, 1, 1, 2], [0], [0]>} : vector<4x8x8xbf16>, vector<4x8x16xbf16>, vector<4x8x16xf32> -> vector<4x8x16xf32>
    "tpu.trace_stop"() : () -> ()
    %58 = vector.extract_strided_slice %57 {offsets = [0, 0, 0], sizes = [1, 8, 16], strides = [1, 1, 1]} : vector<4x8x16xf32> to vector<1x8x16xf32>
    %59 = vector.shape_cast %58 : vector<1x8x16xf32> to vector<8x16xf32>
    %60 = vector.extract_strided_slice %57 {offsets = [1, 0, 0], sizes = [1, 8, 16], strides = [1, 1, 1]} : vector<4x8x16xf32> to vector<1x8x16xf32>
    %61 = vector.shape_cast %60 : vector<1x8x16xf32> to vector<8x16xf32>
    %62 = vector.extract_strided_slice %57 {offsets = [2, 0, 0], sizes = [1, 8, 16], strides = [1, 1, 1]} : vector<4x8x16xf32> to vector<1x8x16xf32>
    %63 = vector.shape_cast %62 : vector<1x8x16xf32> to vector<8x16xf32>
    %64 = vector.extract_strided_slice %57 {offsets = [3, 0, 0], sizes = [1, 8, 16], strides = [1, 1, 1]} : vector<4x8x16xf32> to vector<1x8x16xf32>
    %65 = vector.shape_cast %64 : vector<1x8x16xf32> to vector<8x16xf32>
    %66 = tpu.concatenate %59, %61, %63, %65 in 1 : vector<8x16xf32>, vector<8x16xf32>, vector<8x16xf32>, vector<8x16xf32> -> vector<8x64xf32>
    %67 = arith.truncf %66 : vector<8x64xf32> to vector<8x64xbf16>
    %c0_15 = arith.constant 0 : index
    %c0_16 = arith.constant 0 : index
    %68 = vector.load %arg4[%c0_15, %c0_16] : memref<64x16xbf16, #tpu.memory_space<vmem>>, vector<64x16xbf16>
    %cst_17 = arith.constant dense<0.000000e+00> : vector<8x16xf32>
    %69 = tpu.matmul %67, %68, %cst_17 {dimension_numbers = #tpu.dot_dimension_numbers<[1], [0], [0], [1], [0, 0, 1, 1], [], []>} : vector<8x64xbf16>, vector<64x16xbf16>, vector<8x16xf32> -> vector<8x16xf32>
    %70 = vector.extract_strided_slice %2 {offsets = [3, 0, 0], sizes = [1, 1, 16], strides = [1, 1, 1]} : vector<4x1x64xf32> to vector<1x1x16xf32>
    %71 = vector.shape_cast %70 : vector<1x1x16xf32> to vector<1x16xf32>
    %72 = vector.broadcast %71 : vector<1x16xf32> to vector<8x16xf32>
    %73 = arith.addf %69, %72 : vector<8x16xf32>
    %c0_18 = arith.constant 0 : index
    %c0_19 = arith.constant 0 : index
    %74 = vector.load %arg5[%c0_18, %c0_19] : memref<8x16xf32, #tpu.memory_space<vmem>>, vector<8x16xf32>
    tpu.vector_store %arg5[%c0_18, %c0_19], %73 {strides = array<i32>} : memref<8x16xf32, #tpu.memory_space<vmem>>, vector<8x16xf32>,
    return
  }
}

</mosaic_0001>

<llo_original>
// kernel: tpu_custom_call.1
$region0: #{tpu_custom_call.1}
  #allocation0 [shape = 'u32[]', space=smem, size = 0x4, offset = 0x4, fixed_abs, tag = 'smem constant byte address 0x4 - core index']
  #allocation1 [shape = 'u32[144,128]{1,0:T(1,128)}', space=vmem, size = 0x12000, scoped, tag = 'internal scratch']
  %s0 = inlined_call_operand.hbm [shape: bf16[3,8,32], index: 0, kind: input, shape index: {}]
  %s1 = inlined_call_operand.vmem [shape: f32[4,8,8], index: 1, kind: input, shape index: {}]
  %s2 = inlined_call_operand.hbm [shape: bf16[3,32,64], index: 2, kind: input, shape index: {}]
  %s3 = inlined_call_operand.vmem [shape: f32[4,1,64], index: 3, kind: input, shape index: {}]
  %s4 = inlined_call_operand.vmem [shape: bf16[64,16], index: 4, kind: input, shape index: {}]
  %s5 = inlined_call_operand.hbm [shape: f32[8,16], index: 5, kind: output, shape index: {}]
  %s6 = sld [smem:[#allocation0]]
  $region38: #{tpu_custom_call.1} parent=0
    _
  %s8 = ssub.s32 1, %s6
  %s9 = scalar_select 0, %s8, %s6
  $region1: #{tpu_custom_call.1} parent=0
    #allocation2 [shape = 'u8[6144]{0}', space=vmem, size = 0x1800, scoped, tag = 'input window, operand 0, single buffered']
    #allocation3 [shape = 's32[1]{0}', space=sflag, size = 0x4, scoped, tag = 'scoped memory for tpu_custom_call.1']
    #allocation4 [shape = 's32[1]{0}', space=sflag, size = 0x4, scoped, tag = 'scoped memory for tpu_custom_call.1']
    #allocation5 [shape = 'u8[24576]{0}', space=vmem, size = 0x6000, scoped, tag = 'input window, operand 2, single buffered']
    #allocation6 [shape = 's32[1]{0}', space=sflag, size = 0x4, scoped, tag = 'scoped memory for tpu_custom_call.1']
    #allocation7 [shape = 'u8[4096]{0}', space=vmem, size = 0x1000, scoped, tag = 'output window, operand 0, single buffered']
    %10 = vsyncpa [#allocation3], 0
    %11 = vsyncpa [#allocation6], 0
    %12 = vsyncpa [#allocation4], 0
    // Predicated region
    $region2: #{tpu_custom_call.1} parent=1 // pred_check
      _
    $region3: #{tpu_custom_call.1} parent=1 // pred_check_branch
      %14 = sbr.rel (0) target = $region5
    $region4: #{tpu_custom_call.1} parent=1 // pred_region
      %s16 = ssub.s32 192, 192
      %17 = vsyncadd [#allocation3], %s16
      %s18 = sshll.u32 [#allocation2], 4
      %s19 = int_to_ptr.vmem [resolvable:$true] %s18
      %24 = dma.hbm_to_vmem [thread:$0]  %s0, 192, %s19, [#allocation3], 64, 64, 4
    $region5: #{tpu_custom_call.1} parent=1 // pred_fallthru
      _
    // Predicated region
    $region6: #{tpu_custom_call.1} parent=1 // pred_check
      _
    $region7: #{tpu_custom_call.1} parent=1 // pred_check_branch
      %26 = sbr.rel (0) target = $region9
    $region8: #{tpu_custom_call.1} parent=1 // pred_region
      _
    $region9: #{tpu_custom_call.1} parent=1 // pred_fallthru
      _
    // Predicated region
    $region10: #{tpu_custom_call.1} parent=1 // pred_check
      _
    $region11: #{tpu_custom_call.1} parent=1 // pred_check_branch
      %28 = sbr.rel (0) target = $region13
    $region12: #{tpu_custom_call.1} parent=1 // pred_region
      %s30 = ssub.s32 768, 768
      %31 = vsyncadd [#allocation6], %s30
      %s32 = sshll.u32 [#allocation5], 4
      %s33 = int_to_ptr.vmem [resolvable:$true] %s32
      %38 = dma.hbm_to_vmem [thread:$0]  %s2, 768, %s33, [#allocation6], 64, 64, 4
    $region13: #{tpu_custom_call.1} parent=1 // pred_fallthru
      _
    // Predicated region
    $region14: #{tpu_custom_call.1} parent=1 // pred_check
      _
    $region15: #{tpu_custom_call.1} parent=1 // pred_check_branch
      %40 = sbr.rel (0) target = $region17
    $region16: #{tpu_custom_call.1} parent=1 // pred_region
      _
    $region17: #{tpu_custom_call.1} parent=1 // pred_fallthru
      _
    // Predicated region
    $region18: #{tpu_custom_call.1} parent=1 // pred_check
      _
    $region19: #{tpu_custom_call.1} parent=1 // pred_check_branch
      %42 = sbr.rel (0) target = $region21
    $region20: #{tpu_custom_call.1} parent=1 // pred_region
      _
    $region21: #{tpu_custom_call.1} parent=1 // pred_fallthru
      _
    // Predicated region
    $region22: #{tpu_custom_call.1} parent=1 // pred_check
      _
    $region23: #{tpu_custom_call.1} parent=1 // pred_check_branch
      %44 = sbr.rel (0) target = $region25
    $region24: #{tpu_custom_call.1} parent=1 // pred_region
      %45 = dma.done [#allocation3], 192
    $region25: #{tpu_custom_call.1} parent=1 // pred_fallthru
      _
    // Predicated region
    $region26: #{tpu_custom_call.1} parent=1 // pred_check
      _
    $region27: #{tpu_custom_call.1} parent=1 // pred_check_branch
      %47 = sbr.rel (0) target = $region29
    $region28: #{tpu_custom_call.1} parent=1 // pred_region
      %48 = dma.done [#allocation6], 768
    $region29: #{tpu_custom_call.1} parent=1 // pred_fallthru
      _
    %v50 = vld [vmem:[#allocation2] sm:$0xf]
    %v51 = vld [vmem:[#allocation2 + $0x4] sm:$0xf]
    %v52 = vld [vmem:[#allocation2 + $0x8] sm:$0xf]
    %v53 = vld [vmem:[#allocation5] sm:$0xf]
    %v54 = vld [vmem:[#allocation5 + $0x4] sm:$0xf]
    %v55 = vld [vmem:[#allocation5 + $0x8] sm:$0xf]
    %v56 = vld [vmem:[#allocation5 + $0xc] sm:$0xf]
    %v57 = vld [vmem:[#allocation5 + $0x10] sm:$0xf]
    %v58 = vld [vmem:[#allocation5 + $0x14] sm:$0xf]
    %v59 = vld [vmem:[#allocation5 + $0x18] sm:$0xf]
    %v60 = vld [vmem:[#allocation5 + $0x1c] sm:$0xf]
    %v61 = vld [vmem:[#allocation5 + $0x20] sm:$0xf]
    %v62 = vld [vmem:[#allocation5 + $0x24] sm:$0xf]
    %v63 = vld [vmem:[#allocation5 + $0x28] sm:$0xf]
    %v64 = vld [vmem:[#allocation5 + $0x2c] sm:$0xf]
    %v65 = vld [vmem:[%s3] sm:$0x1]
    %v66 = vld [vmem:[%s3 + $0x1] sm:$0x1]
    %v67 = vld [vmem:[%s3 + $0x2] sm:$0x1]
    %v68 = vld [vmem:[%s3 + $0x3] sm:$0x1]
    %v72 = vlaneseq
    %v73 = vshrl.u32 %v72, 7
    %v74 = vsub.s32 0, %v73
    %v75 = vrot.slane %v65, %v74
    %v76 = vlaneseq
    %v77 = vshrl.u32 %v76, 7
    %v78 = vsub.s32 0, %v77
    %v79 = vrot.slane %v66, %v78
    %v80 = vlaneseq
    %v81 = vshrl.u32 %v80, 7
    %v82 = vsub.s32 0, %v81
    %v83 = vrot.slane %v67, %v82
    %v91 = vunpack.c.l.b16 %v53
    %v92 = vunpack.c.l.b16 %v54
    %v93 = vunpack.c.l.b16 %v55
    %v94 = vunpack.c.l.b16 %v56
    %v95 = vpack.c.b16 %v92, %v91
    %v96 = vpack.c.b16 %v94, %v93
    %vm99 = vcmask 261120
    %v101 = vsel %vm99, %v50, 0
    %103 = vmatprep.subr.bf16.mxu0 0
    %104 = vmatpush1.bf16.msra.mxu0 %v95
    %105 = vmatprep.subr.bf16.mxu0 0
    %106 = vmatpush1.bf16.msra.mxu0 %v96
    %107 = vmatprep.subr.bf16.mxu0 0
    %108 = vmatpush1.bf16.msra.mxu0 0
    %109 = vmatprep.subr.bf16.mxu0 0
    %110 = vmatpush1.bf16.msra.mxu0 0
    %111 = vmatprep.subr.bf16.mxu0 0
    %112 = vmatpush1.bf16.msra.mxu0 0
    %113 = vmatprep.subr.bf16.mxu0 0
    %114 = vmatpush1.bf16.msra.mxu0 0
    %115 = vmatprep.subr.bf16.mxu0 0
    %116 = vmatpush1.bf16.msra.mxu0 0
    %117 = vmatprep.subr.bf16.mxu0 0
    %118 = vmatpush1.bf16.msra.mxu0 0
    %119 = vmatprep.subr.bf16.mxu0 0
    %120 = vmatpush1.bf16.msra.mxu0 0
    %121 = vmatprep.subr.bf16.mxu0 0
    %122 = vmatpush1.bf16.msra.mxu0 0
    %123 = vmatprep.subr.bf16.mxu0 0
    %124 = vmatpush1.bf16.msra.mxu0 0
    %125 = vmatprep.subr.bf16.mxu0 0
    %126 = vmatpush1.bf16.msra.mxu0 0
    %127 = vmatprep.subr.bf16.mxu0 0
    %128 = vmatpush1.bf16.msra.mxu0 0
    %129 = vmatprep.subr.bf16.mxu0 0
    %130 = vmatpush1.bf16.msra.mxu0 0
    %131 = vmatprep.subr.bf16.mxu0 0
    %132 = vmatpush1.bf16.msra.mxu0 0
    %133 = vmatprep.subr.bf16.mxu0 0
    %134 = vmatpush1.bf16.msra.mxu0 0
    %135 = vmatprep.mubr.bf16.mxu0 0
    %136 = vmatmul.mubr.bf16.gmra.mrb[0].mxu0 %v101
    %v137 = vpop.f32.mrb[0].mxu0
    %v138 = vadd.f32 %v75, %v137
    %v139 = vpop.f32.mrb[0].mxu0
    %v140 = vpop.f32.mrb[0].mxu0
    %v141 = vpop.f32.mrb[0].mxu0
    %142 = vdwg.mxu0
    %v147 = vunpack.c.l.b16 %v57
    %v148 = vunpack.c.l.b16 %v58
    %v149 = vunpack.c.l.b16 %v59
    %v150 = vunpack.c.l.b16 %v60
    %v151 = vpack.c.b16 %v148, %v147
    %v152 = vpack.c.b16 %v150, %v149
    %v156 = vsel %vm99, %v51, 0
    %158 = vmatprep.subr.bf16.mxu0 0
    %159 = vmatpush1.bf16.msra.mxu0 %v151
    %160 = vmatprep.subr.bf16.mxu0 0
    %161 = vmatpush1.bf16.msra.mxu0 %v152
    %162 = vmatprep.subr.bf16.mxu0 0
    %163 = vmatpush1.bf16.msra.mxu0 0
    %164 = vmatprep.subr.bf16.mxu0 0
    %165 = vmatpush1.bf16.msra.mxu0 0
    %166 = vmatprep.subr.bf16.mxu0 0
    %167 = vmatpush1.bf16.msra.mxu0 0
    %168 = vmatprep.subr.bf16.mxu0 0
    %169 = vmatpush1.bf16.msra.mxu0 0
    %170 = vmatprep.subr.bf16.mxu0 0
    %171 = vmatpush1.bf16.msra.mxu0 0
    %172 = vmatprep.subr.bf16.mxu0 0
    %173 = vmatpush1.bf16.msra.mxu0 0
    %174 = vmatprep.subr.bf16.mxu0 0
    %175 = vmatpush1.bf16.msra.mxu0 0
    %176 = vmatprep.subr.bf16.mxu0 0
    %177 = vmatpush1.bf16.msra.mxu0 0
    %178 = vmatprep.subr.bf16.mxu0 0
    %179 = vmatpush1.bf16.msra.mxu0 0
    %180 = vmatprep.subr.bf16.mxu0 0
    %181 = vmatpush1.bf16.msra.mxu0 0
    %182 = vmatprep.subr.bf16.mxu0 0
    %183 = vmatpush1.bf16.msra.mxu0 0
    %184 = vmatprep.subr.bf16.mxu0 0
    %185 = vmatpush1.bf16.msra.mxu0 0
    %186 = vmatprep.subr.bf16.mxu0 0
    %187 = vmatpush1.bf16.msra.mxu0 0
    %188 = vmatprep.subr.bf16.mxu0 0
    %189 = vmatpush1.bf16.msra.mxu0 0
    %190 = vmatprep.mubr.bf16.mxu0 0
    %191 = vmatmul.mubr.bf16.gmra.mrb[0].mxu0 %v156
    %v192 = vpop.f32.mrb[0].mxu0
    %v193 = vadd.f32 %v79, %v192
    %v194 = vpop.f32.mrb[0].mxu0
    %v195 = vpop.f32.mrb[0].mxu0
    %v196 = vpop.f32.mrb[0].mxu0
    %197 = vdwg.mxu0
    %v202 = vunpack.c.l.b16 %v61
    %v203 = vunpack.c.l.b16 %v62
    %v204 = vunpack.c.l.b16 %v63
    %v205 = vunpack.c.l.b16 %v64
    %v206 = vpack.c.b16 %v203, %v202
    %v207 = vpack.c.b16 %v205, %v204
    %v211 = vsel %vm99, %v52, 0
    %213 = vmatprep.subr.bf16.mxu0 0
    %214 = vmatpush1.bf16.msra.mxu0 %v206
    %215 = vmatprep.subr.bf16.mxu0 0
    %216 = vmatpush1.bf16.msra.mxu0 %v207
    %217 = vmatprep.subr.bf16.mxu0 0
    %218 = vmatpush1.bf16.msra.mxu0 0
    %219 = vmatprep.subr.bf16.mxu0 0
    %220 = vmatpush1.bf16.msra.mxu0 0
    %221 = vmatprep.subr.bf16.mxu0 0
    %222 = vmatpush1.bf16.msra.mxu0 0
    %223 = vmatprep.subr.bf16.mxu0 0
    %224 = vmatpush1.bf16.msra.mxu0 0
    %225 = vmatprep.subr.bf16.mxu0 0
    %226 = vmatpush1.bf16.msra.mxu0 0
    %227 = vmatprep.subr.bf16.mxu0 0
    %228 = vmatpush1.bf16.msra.mxu0 0
    %229 = vmatprep.subr.bf16.mxu0 0
    %230 = vmatpush1.bf16.msra.mxu0 0
    %231 = vmatprep.subr.bf16.mxu0 0
    %232 = vmatpush1.bf16.msra.mxu0 0
    %233 = vmatprep.subr.bf16.mxu0 0
    %234 = vmatpush1.bf16.msra.mxu0 0
    %235 = vmatprep.subr.bf16.mxu0 0
    %236 = vmatpush1.bf16.msra.mxu0 0
    %237 = vmatprep.subr.bf16.mxu0 0
    %238 = vmatpush1.bf16.msra.mxu0 0
    %239 = vmatprep.subr.bf16.mxu0 0
    %240 = vmatpush1.bf16.msra.mxu0 0
    %241 = vmatprep.subr.bf16.mxu0 0
    %242 = vmatpush1.bf16.msra.mxu0 0
    %243 = vmatprep.subr.bf16.mxu0 0
    %244 = vmatpush1.bf16.msra.mxu0 0
    %245 = vmatprep.mubr.bf16.mxu0 0
    %246 = vmatmul.mubr.bf16.gmra.mrb[0].mxu0 %v211
    %v247 = vpop.f32.mrb[0].mxu0
    %v248 = vadd.f32 %v83, %v247
    %v249 = vpop.f32.mrb[0].mxu0
    %v250 = vpop.f32.mrb[0].mxu0
    %v251 = vpop.f32.mrb[0].mxu0
    %252 = vdwg.mxu0
    %v253 = vpack.c.bf16 %v138, %v138
    %255 = vrot.lane.b32.xlu0 %v253, 112
    %v256 = vpop.permute.xlu0 %255
    %257 = vrot.lane.b32.xlu0 %v253, 96
    %v258 = vpop.permute.xlu0 %257
    %259 = vrot.lane.b32.xlu0 %v253, 80
    %v260 = vpop.permute.xlu0 %259
    %v261 = vpack.c.bf16 %v193, %v193
    %263 = vrot.lane.b32.xlu0 %v261, 112
    %v264 = vpop.permute.xlu0 %263
    %265 = vrot.lane.b32.xlu0 %v261, 96
    %v266 = vpop.permute.xlu0 %265
    %267 = vrot.lane.b32.xlu0 %v261, 80
    %v268 = vpop.permute.xlu0 %267
    %v269 = vpack.c.bf16 %v248, %v248
    %271 = vrot.lane.b32.xlu0 %v269, 112
    %v272 = vpop.permute.xlu0 %271
    %273 = vrot.lane.b32.xlu0 %v269, 96
    %v274 = vpop.permute.xlu0 %273
    %275 = vrot.lane.b32.xlu0 %v269, 80
    %v276 = vpop.permute.xlu0 %275
    %vm277 = vcmask 130048
    %v279 = vsel %vm277, %v253, 0
    %v282 = vsel %vm277, %v261, 0
    %284 = vmatprep.subr.bf16.mxu0 0
    %285 = vmatpush1.bf16.xpose.msra.mxu0 %v282
    %286 = vmatprep.subr.bf16.mxu0 0
    %287 = vmatpush1.bf16.xpose.msra.mxu0 0
    %288 = vmatprep.subr.bf16.mxu0 0
    %289 = vmatpush1.bf16.xpose.msra.mxu0 0
    %290 = vmatprep.subr.bf16.mxu0 0
    %291 = vmatpush1.bf16.xpose.msra.mxu0 0
    %292 = vmatprep.subr.bf16.mxu0 0
    %293 = vmatpush1.bf16.xpose.msra.mxu0 0
    %294 = vmatprep.subr.bf16.mxu0 0
    %295 = vmatpush1.bf16.xpose.msra.mxu0 0
    %296 = vmatprep.subr.bf16.mxu0 0
    %297 = vmatpush1.bf16.xpose.msra.mxu0 0
    %298 = vmatprep.subr.bf16.mxu0 0
    %299 = vmatpush1.bf16.xpose.msra.mxu0 0
    %300 = vmatprep.subr.bf16.mxu0 0
    %301 = vmatpush1.bf16.xpose.msra.mxu0 0
    %302 = vmatprep.subr.bf16.mxu0 0
    %303 = vmatpush1.bf16.xpose.msra.mxu0 0
    %304 = vmatprep.subr.bf16.mxu0 0
    %305 = vmatpush1.bf16.xpose.msra.mxu0 0
    %306 = vmatprep.subr.bf16.mxu0 0
    %307 = vmatpush1.bf16.xpose.msra.mxu0 0
    %308 = vmatprep.subr.bf16.mxu0 0
    %309 = vmatpush1.bf16.xpose.msra.mxu0 0
    %310 = vmatprep.subr.bf16.mxu0 0
    %311 = vmatpush1.bf16.xpose.msra.mxu0 0
    %312 = vmatprep.subr.bf16.mxu0 0
    %313 = vmatpush1.bf16.xpose.msra.mxu0 0
    %314 = vmatprep.subr.bf16.mxu0 0
    %315 = vmatpush1.bf16.xpose.msra.mxu0 0
    %316 = vmatprep.mubr.bf16.mxu0 0
    %317 = vmatmul.mubr.bf16.gmra.mrb[0].mxu0 %v279
    %v318 = vpop.f32.mrb[0].mxu0
    %v319 = vadd.f32 0.0, %v318
    %v320 = vpop.f32.mrb[0].mxu0
    %v321 = vpop.f32.mrb[0].mxu0
    %v322 = vpop.f32.mrb[0].mxu0
    %323 = vdwg.mxu0
    %v325 = vsel %vm277, %v256, 0
    %v328 = vsel %vm277, %v264, 0
    %330 = vmatprep.subr.bf16.mxu0 0
    %331 = vmatpush1.bf16.xpose.msra.mxu0 %v328
    %332 = vmatprep.subr.bf16.mxu0 0
    %333 = vmatpush1.bf16.xpose.msra.mxu0 0
    %334 = vmatprep.subr.bf16.mxu0 0
    %335 = vmatpush1.bf16.xpose.msra.mxu0 0
    %336 = vmatprep.subr.bf16.mxu0 0
    %337 = vmatpush1.bf16.xpose.msra.mxu0 0
    %338 = vmatprep.subr.bf16.mxu0 0
    %339 = vmatpush1.bf16.xpose.msra.mxu0 0
    %340 = vmatprep.subr.bf16.mxu0 0
    %341 = vmatpush1.bf16.xpose.msra.mxu0 0
    %342 = vmatprep.subr.bf16.mxu0 0
    %343 = vmatpush1.bf16.xpose.msra.mxu0 0
    %344 = vmatprep.subr.bf16.mxu0 0
    %345 = vmatpush1.bf16.xpose.msra.mxu0 0
    %346 = vmatprep.subr.bf16.mxu0 0
    %347 = vmatpush1.bf16.xpose.msra.mxu0 0
    %348 = vmatprep.subr.bf16.mxu0 0
    %349 = vmatpush1.bf16.xpose.msra.mxu0 0
    %350 = vmatprep.subr.bf16.mxu0 0
    %351 = vmatpush1.bf16.xpose.msra.mxu0 0
    %352 = vmatprep.subr.bf16.mxu0 0
    %353 = vmatpush1.bf16.xpose.msra.mxu0 0
    %354 = vmatprep.subr.bf16.mxu0 0
    %355 = vmatpush1.bf16.xpose.msra.mxu0 0
    %356 = vmatprep.subr.bf16.mxu0 0
    %357 = vmatpush1.bf16.xpose.msra.mxu0 0
    %358 = vmatprep.subr.bf16.mxu0 0
    %359 = vmatpush1.bf16.xpose.msra.mxu0 0
    %360 = vmatprep.subr.bf16.mxu0 0
    %361 = vmatpush1.bf16.xpose.msra.mxu0 0
    %362 = vmatprep.mubr.bf16.mxu0 0
    %363 = vmatmul.mubr.bf16.gmra.mrb[0].mxu0 %v325
    %v364 = vpop.f32.mrb[0].mxu0
    %v365 = vadd.f32 0.0, %v364
    %v366 = vpop.f32.mrb[0].mxu0
    %v367 = vpop.f32.mrb[0].mxu0
    %v368 = vpop.f32.mrb[0].mxu0
    %369 = vdwg.mxu0
    %v371 = vsel %vm277, %v258, 0
    %v374 = vsel %vm277, %v266, 0
    %376 = vmatprep.subr.bf16.mxu0 0
    %377 = vmatpush1.bf16.xpose.msra.mxu0 %v374
    %378 = vmatprep.subr.bf16.mxu0 0
    %379 = vmatpush1.bf16.xpose.msra.mxu0 0
    %380 = vmatprep.subr.bf16.mxu0 0
    %381 = vmatpush1.bf16.xpose.msra.mxu0 0
    %382 = vmatprep.subr.bf16.mxu0 0
    %383 = vmatpush1.bf16.xpose.msra.mxu0 0
    %384 = vmatprep.subr.bf16.mxu0 0
    %385 = vmatpush1.bf16.xpose.msra.mxu0 0
    %386 = vmatprep.subr.bf16.mxu0 0
    %387 = vmatpush1.bf16.xpose.msra.mxu0 0
    %388 = vmatprep.subr.bf16.mxu0 0
    %389 = vmatpush1.bf16.xpose.msra.mxu0 0
    %390 = vmatprep.subr.bf16.mxu0 0
    %391 = vmatpush1.bf16.xpose.msra.mxu0 0
    %392 = vmatprep.subr.bf16.mxu0 0
    %393 = vmatpush1.bf16.xpose.msra.mxu0 0
    %394 = vmatprep.subr.bf16.mxu0 0
    %395 = vmatpush1.bf16.xpose.msra.mxu0 0
    %396 = vmatprep.subr.bf16.mxu0 0
    %397 = vmatpush1.bf16.xpose.msra.mxu0 0
    %398 = vmatprep.subr.bf16.mxu0 0
    %399 = vmatpush1.bf16.xpose.msra.mxu0 0
    %400 = vmatprep.subr.bf16.mxu0 0
    %401 = vmatpush1.bf16.xpose.msra.mxu0 0
    %402 = vmatprep.subr.bf16.mxu0 0
    %403 = vmatpush1.bf16.xpose.msra.mxu0 0
    %404 = vmatprep.subr.bf16.mxu0 0
    %405 = vmatpush1.bf16.xpose.msra.mxu0 0
    %406 = vmatprep.subr.bf16.mxu0 0
    %407 = vmatpush1.bf16.xpose.msra.mxu0 0
    %408 = vmatprep.mubr.bf16.mxu0 0
    %409 = vmatmul.mubr.bf16.gmra.mrb[0].mxu0 %v371
    %v410 = vpop.f32.mrb[0].mxu0
    %v411 = vadd.f32 0.0, %v410
    %v412 = vpop.f32.mrb[0].mxu0
    %v413 = vpop.f32.mrb[0].mxu0
    %v414 = vpop.f32.mrb[0].mxu0
    %415 = vdwg.mxu0
    %v417 = vsel %vm277, %v260, 0
    %v420 = vsel %vm277, %v268, 0
    %422 = vmatprep.subr.bf16.mxu0 0
    %423 = vmatpush1.bf16.xpose.msra.mxu0 %v420
    %424 = vmatprep.subr.bf16.mxu0 0
    %425 = vmatpush1.bf16.xpose.msra.mxu0 0
    %426 = vmatprep.subr.bf16.mxu0 0
    %427 = vmatpush1.bf16.xpose.msra.mxu0 0
    %428 = vmatprep.subr.bf16.mxu0 0
    %429 = vmatpush1.bf16.xpose.msra.mxu0 0
    %430 = vmatprep.subr.bf16.mxu0 0
    %431 = vmatpush1.bf16.xpose.msra.mxu0 0
    %432 = vmatprep.subr.bf16.mxu0 0
    %433 = vmatpush1.bf16.xpose.msra.mxu0 0
    %434 = vmatprep.subr.bf16.mxu0 0
    %435 = vmatpush1.bf16.xpose.msra.mxu0 0
    %436 = vmatprep.subr.bf16.mxu0 0
    %437 = vmatpush1.bf16.xpose.msra.mxu0 0
    %438 = vmatprep.subr.bf16.mxu0 0
    %439 = vmatpush1.bf16.xpose.msra.mxu0 0
    %440 = vmatprep.subr.bf16.mxu0 0
    %441 = vmatpush1.bf16.xpose.msra.mxu0 0
    %442 = vmatprep.subr.bf16.mxu0 0
    %443 = vmatpush1.bf16.xpose.msra.mxu0 0
    %444 = vmatprep.subr.bf16.mxu0 0
    %445 = vmatpush1.bf16.xpose.msra.mxu0 0
    %446 = vmatprep.subr.bf16.mxu0 0
    %447 = vmatpush1.bf16.xpose.msra.mxu0 0
    %448 = vmatprep.subr.bf16.mxu0 0
    %449 = vmatpush1.bf16.xpose.msra.mxu0 0
    %450 = vmatprep.subr.bf16.mxu0 0
    %451 = vmatpush1.bf16.xpose.msra.mxu0 0
    %452 = vmatprep.subr.bf16.mxu0 0
    %453 = vmatpush1.bf16.xpose.msra.mxu0 0
    %454 = vmatprep.mubr.bf16.mxu0 0
    %455 = vmatmul.mubr.bf16.gmra.mrb[0].mxu0 %v417
    %v456 = vpop.f32.mrb[0].mxu0
    %v457 = vadd.f32 0.0, %v456
    %v458 = vpop.f32.mrb[0].mxu0
    %v459 = vpop.f32.mrb[0].mxu0
    %v460 = vpop.f32.mrb[0].mxu0
    %461 = vdwg.mxu0
    %v462 = vld [vmem:[%s1] sm:$0xff]
    %v463 = vld [vmem:[%s1 + $0x8] sm:$0xff]
    %v464 = vld [vmem:[%s1 + $0x10] sm:$0xff]
    %v465 = vld [vmem:[%s1 + $0x18] sm:$0xff]
    %v466 = vmul.f32 %v319, %v462
    %v467 = vmul.f32 %v365, %v463
    %v468 = vmul.f32 %v411, %v464
    %v469 = vmul.f32 %v457, %v465
    %vm470 = vcmask 64512
    %v471 = vsel %vm470, %v466, -inf
    %472 = vmax.xlane.f32.xlu0 %v471
    %v473 = vpop.xlane.xlu0 %472
    %v474 = vsel %vm470, %v467, -inf
    %475 = vmax.xlane.f32.xlu0 %v474
    %v476 = vpop.xlane.xlu0 %475
    %v477 = vsel %vm470, %v468, -inf
    %478 = vmax.xlane.f32.xlu0 %v477
    %v479 = vpop.xlane.xlu0 %478
    %v480 = vsel %vm470, %v469, -inf
    %481 = vmax.xlane.f32.xlu0 %v480
    %v482 = vpop.xlane.xlu0 %481
    %v483 = vsub.f32 %v466, %v473
    %v484 = vsub.f32 %v467, %v476
    %v485 = vsub.f32 %v468, %v479
    %v486 = vsub.f32 %v469, %v482
    %v487 = vmul.f32 %v483, 1.442695
    %v488 = vpow.pop %v487
    %v489 = vmul.f32 %v484, 1.442695
    %v490 = vpow.pop %v489
    %v491 = vmul.f32 %v485, 1.442695
    %v492 = vpow.pop %v491
    %v493 = vmul.f32 %v486, 1.442695
    %v494 = vpow.pop %v493
    %v495 = vsel %vm470, %v488, 0.0
    %496 = vadd.xlane.f32.xlu0 %v495
    %v497 = vpop.xlane.xlu0 %496
    %v498 = vsel %vm470, %v490, 0.0
    %499 = vadd.xlane.f32.xlu0 %v498
    %v500 = vpop.xlane.xlu0 %499
    %v501 = vsel %vm470, %v492, 0.0
    %502 = vadd.xlane.f32.xlu0 %v501
    %v503 = vpop.xlane.xlu0 %502
    %v504 = vsel %vm470, %v494, 0.0
    %505 = vadd.xlane.f32.xlu0 %v504
    %v506 = vpop.xlane.xlu0 %505
    %v507 = vrcp.pop %v497
    %v508 = vrcp.pop %v500
    %v509 = vrcp.pop %v503
    %v510 = vrcp.pop %v506
    %v511 = vmul.f32 %v488, %v507
    %v512 = vmul.f32 %v490, %v508
    %v513 = vmul.f32 %v492, %v509
    %v514 = vmul.f32 %v494, %v510
    %v515 = vpack.c.bf16 %v511, %v511
    %v516 = vpack.c.bf16 %v512, %v512
    %v517 = vpack.c.bf16 %v513, %v513
    %v518 = vpack.c.bf16 %v514, %v514
    %v520 = vsel %vm470, %v515, 0
    %vm522 = vcmask 1043456
    %v524 = vsel %vm522, %v269, 0
    %526 = vmatprep.subr.bf16.mxu0 0
    %527 = vmatpush1.bf16.msra.mxu0 %v524
    %528 = vmatprep.subr.bf16.mxu0 0
    %529 = vmatpush1.bf16.msra.mxu0 0
    %530 = vmatprep.subr.bf16.mxu0 0
    %531 = vmatpush1.bf16.msra.mxu0 0
    %532 = vmatprep.subr.bf16.mxu0 0
    %533 = vmatpush1.bf16.msra.mxu0 0
    %534 = vmatprep.subr.bf16.mxu0 0
    %535 = vmatpush1.bf16.msra.mxu0 0
    %536 = vmatprep.subr.bf16.mxu0 0
    %537 = vmatpush1.bf16.msra.mxu0 0
    %538 = vmatprep.subr.bf16.mxu0 0
    %539 = vmatpush1.bf16.msra.mxu0 0
    %540 = vmatprep.subr.bf16.mxu0 0
    %541 = vmatpush1.bf16.msra.mxu0 0
    %542 = vmatprep.subr.bf16.mxu0 0
    %543 = vmatpush1.bf16.msra.mxu0 0
    %544 = vmatprep.subr.bf16.mxu0 0
    %545 = vmatpush1.bf16.msra.mxu0 0
    %546 = vmatprep.subr.bf16.mxu0 0
    %547 = vmatpush1.bf16.msra.mxu0 0
    %548 = vmatprep.subr.bf16.mxu0 0
    %549 = vmatpush1.bf16.msra.mxu0 0
    %550 = vmatprep.subr.bf16.mxu0 0
    %551 = vmatpush1.bf16.msra.mxu0 0
    %552 = vmatprep.subr.bf16.mxu0 0
    %553 = vmatpush1.bf16.msra.mxu0 0
    %554 = vmatprep.subr.bf16.mxu0 0
    %555 = vmatpush1.bf16.msra.mxu0 0
    %556 = vmatprep.subr.bf16.mxu0 0
    %557 = vmatpush1.bf16.msra.mxu0 0
    %558 = vmatprep.mubr.bf16.mxu0 0
    %559 = vmatmul.mubr.bf16.gmra.mrb[0].mxu0 %v520
    %v560 = vpop.f32.mrb[0].mxu0
    %v561 = vadd.f32 0.0, %v560
    %v562 = vpop.f32.mrb[0].mxu0
    %v563 = vpop.f32.mrb[0].mxu0
    %v564 = vpop.f32.mrb[0].mxu0
    %565 = vdwg.mxu0
    %v567 = vsel %vm470, %v516, 0
    %v570 = vsel %vm522, %v272, 0
    %572 = vmatprep.subr.bf16.mxu0 0
    %573 = vmatpush1.bf16.msra.mxu0 %v570
    %574 = vmatprep.subr.bf16.mxu0 0
    %575 = vmatpush1.bf16.msra.mxu0 0
    %576 = vmatprep.subr.bf16.mxu0 0
    %577 = vmatpush1.bf16.msra.mxu0 0
    %578 = vmatprep.subr.bf16.mxu0 0
    %579 = vmatpush1.bf16.msra.mxu0 0
    %580 = vmatprep.subr.bf16.mxu0 0
    %581 = vmatpush1.bf16.msra.mxu0 0
    %582 = vmatprep.subr.bf16.mxu0 0
    %583 = vmatpush1.bf16.msra.mxu0 0
    %584 = vmatprep.subr.bf16.mxu0 0
    %585 = vmatpush1.bf16.msra.mxu0 0
    %586 = vmatprep.subr.bf16.mxu0 0
    %587 = vmatpush1.bf16.msra.mxu0 0
    %588 = vmatprep.subr.bf16.mxu0 0
    %589 = vmatpush1.bf16.msra.mxu0 0
    %590 = vmatprep.subr.bf16.mxu0 0
    %591 = vmatpush1.bf16.msra.mxu0 0
    %592 = vmatprep.subr.bf16.mxu0 0
    %593 = vmatpush1.bf16.msra.mxu0 0
    %594 = vmatprep.subr.bf16.mxu0 0
    %595 = vmatpush1.bf16.msra.mxu0 0
    %596 = vmatprep.subr.bf16.mxu0 0
    %597 = vmatpush1.bf16.msra.mxu0 0
    %598 = vmatprep.subr.bf16.mxu0 0
    %599 = vmatpush1.bf16.msra.mxu0 0
    %600 = vmatprep.subr.bf16.mxu0 0
    %601 = vmatpush1.bf16.msra.mxu0 0
    %602 = vmatprep.subr.bf16.mxu0 0
    %603 = vmatpush1.bf16.msra.mxu0 0
    %604 = vmatprep.mubr.bf16.mxu0 0
    %605 = vmatmul.mubr.bf16.gmra.mrb[0].mxu0 %v567
    %v606 = vpop.f32.mrb[0].mxu0
    %v607 = vadd.f32 0.0, %v606
    %v608 = vpop.f32.mrb[0].mxu0
    %v609 = vpop.f32.mrb[0].mxu0
    %v610 = vpop.f32.mrb[0].mxu0
    %611 = vdwg.mxu0
    %v613 = vsel %vm470, %v517, 0
    %v616 = vsel %vm522, %v274, 0
    %618 = vmatprep.subr.bf16.mxu0 0
    %619 = vmatpush1.bf16.msra.mxu0 %v616
    %620 = vmatprep.subr.bf16.mxu0 0
    %621 = vmatpush1.bf16.msra.mxu0 0
    %622 = vmatprep.subr.bf16.mxu0 0
    %623 = vmatpush1.bf16.msra.mxu0 0
    %624 = vmatprep.subr.bf16.mxu0 0
    %625 = vmatpush1.bf16.msra.mxu0 0
    %626 = vmatprep.subr.bf16.mxu0 0
    %627 = vmatpush1.bf16.msra.mxu0 0
    %628 = vmatprep.subr.bf16.mxu0 0
    %629 = vmatpush1.bf16.msra.mxu0 0
    %630 = vmatprep.subr.bf16.mxu0 0
    %631 = vmatpush1.bf16.msra.mxu0 0
    %632 = vmatprep.subr.bf16.mxu0 0
    %633 = vmatpush1.bf16.msra.mxu0 0
    %634 = vmatprep.subr.bf16.mxu0 0
    %635 = vmatpush1.bf16.msra.mxu0 0
    %636 = vmatprep.subr.bf16.mxu0 0
    %637 = vmatpush1.bf16.msra.mxu0 0
    %638 = vmatprep.subr.bf16.mxu0 0
    %639 = vmatpush1.bf16.msra.mxu0 0
    %640 = vmatprep.subr.bf16.mxu0 0
    %641 = vmatpush1.bf16.msra.mxu0 0
    %642 = vmatprep.subr.bf16.mxu0 0
    %643 = vmatpush1.bf16.msra.mxu0 0
    %644 = vmatprep.subr.bf16.mxu0 0
    %645 = vmatpush1.bf16.msra.mxu0 0
    %646 = vmatprep.subr.bf16.mxu0 0
    %647 = vmatpush1.bf16.msra.mxu0 0
    %648 = vmatprep.subr.bf16.mxu0 0
    %649 = vmatpush1.bf16.msra.mxu0 0
    %650 = vmatprep.mubr.bf16.mxu0 0
    %651 = vmatmul.mubr.bf16.gmra.mrb[0].mxu0 %v613
    %v652 = vpop.f32.mrb[0].mxu0
    %v653 = vadd.f32 0.0, %v652
    %v654 = vpop.f32.mrb[0].mxu0
    %v655 = vpop.f32.mrb[0].mxu0
    %v656 = vpop.f32.mrb[0].mxu0
    %657 = vdwg.mxu0
    %v659 = vsel %vm470, %v518, 0
    %v662 = vsel %vm522, %v276, 0
    %664 = vmatprep.subr.bf16.mxu0 0
    %665 = vmatpush1.bf16.msra.mxu0 %v662
    %666 = vmatprep.subr.bf16.mxu0 0
    %667 = vmatpush1.bf16.msra.mxu0 0
    %668 = vmatprep.subr.bf16.mxu0 0
    %669 = vmatpush1.bf16.msra.mxu0 0
    %670 = vmatprep.subr.bf16.mxu0 0
    %671 = vmatpush1.bf16.msra.mxu0 0
    %672 = vmatprep.subr.bf16.mxu0 0
    %673 = vmatpush1.bf16.msra.mxu0 0
    %674 = vmatprep.subr.bf16.mxu0 0
    %675 = vmatpush1.bf16.msra.mxu0 0
    %676 = vmatprep.subr.bf16.mxu0 0
    %677 = vmatpush1.bf16.msra.mxu0 0
    %678 = vmatprep.subr.bf16.mxu0 0
    %679 = vmatpush1.bf16.msra.mxu0 0
    %680 = vmatprep.subr.bf16.mxu0 0
    %681 = vmatpush1.bf16.msra.mxu0 0
    %682 = vmatprep.subr.bf16.mxu0 0
    %683 = vmatpush1.bf16.msra.mxu0 0
    %684 = vmatprep.subr.bf16.mxu0 0
    %685 = vmatpush1.bf16.msra.mxu0 0
    %686 = vmatprep.subr.bf16.mxu0 0
    %687 = vmatpush1.bf16.msra.mxu0 0
    %688 = vmatprep.subr.bf16.mxu0 0
    %689 = vmatpush1.bf16.msra.mxu0 0
    %690 = vmatprep.subr.bf16.mxu0 0
    %691 = vmatpush1.bf16.msra.mxu0 0
    %692 = vmatprep.subr.bf16.mxu0 0
    %693 = vmatpush1.bf16.msra.mxu0 0
    %694 = vmatprep.subr.bf16.mxu0 0
    %695 = vmatpush1.bf16.msra.mxu0 0
    %696 = vmatprep.mubr.bf16.mxu0 0
    %697 = vmatmul.mubr.bf16.gmra.mrb[0].mxu0 %v659
    %v698 = vpop.f32.mrb[0].mxu0
    %v699 = vadd.f32 0.0, %v698
    %v700 = vpop.f32.mrb[0].mxu0
    %v701 = vpop.f32.mrb[0].mxu0
    %v702 = vpop.f32.mrb[0].mxu0
    %703 = vdwg.mxu0
    %705 = vrot.lane.b32.xlu0 %v607, 16
    %v706 = vpop.permute.xlu0 %705
    %709 = vrot.lane.b32.xlu0 %v653, 32
    %v710 = vpop.permute.xlu0 %709
    %713 = vrot.lane.b32.xlu0 %v699, 48
    %v714 = vpop.permute.xlu0 %713
    %v716 = vsel %vm277, %v561, %v706
    %v717 = vsel %vm99, %v716, %v710
    %vm718 = vcmask 392192
    %v719 = vsel %vm718, %v717, %v714
    %v720 = vpack.c.bf16 %v719, %v719
    %v721 = vld [vmem:[%s4] sm:$0xf]
    %v722 = vld [vmem:[%s4 + $0x4] sm:$0xf]
    %v723 = vld [vmem:[%s4 + $0x8] sm:$0xf]
    %v724 = vld [vmem:[%s4 + $0xc] sm:$0xf]
    %v725 = vld [vmem:[%s4 + $0x10] sm:$0xf]
    %v726 = vld [vmem:[%s4 + $0x14] sm:$0xf]
    %v727 = vld [vmem:[%s4 + $0x18] sm:$0xf]
    %v728 = vld [vmem:[%s4 + $0x1c] sm:$0xf]
    %v730 = vlaneseq
    %v731 = vshrl.u32 %v730, 7
    %v732 = vsub.s32 0, %v731
    %v733 = vrot.slane %v68, %v732
    %v743 = vunpack.c.l.b16 %v721
    %v744 = vunpack.c.l.b16 %v722
    %v745 = vunpack.c.l.b16 %v723
    %v746 = vunpack.c.l.b16 %v724
    %v747 = vunpack.c.l.b16 %v725
    %v748 = vunpack.c.l.b16 %v726
    %v749 = vunpack.c.l.b16 %v727
    %v750 = vunpack.c.l.b16 %v728
    %v751 = vpack.c.b16 %v744, %v743
    %v752 = vpack.c.b16 %v746, %v745
    %v753 = vpack.c.b16 %v748, %v747
    %v754 = vpack.c.b16 %v750, %v749
    %vm759 = vcmask 523264
    %v761 = vsel %vm759, %v720, 0
    %763 = vmatprep.subr.bf16.mxu0 0
    %764 = vmatpush1.bf16.msra.mxu0 %v751
    %765 = vmatprep.subr.bf16.mxu0 0
    %766 = vmatpush1.bf16.msra.mxu0 %v752
    %767 = vmatprep.subr.bf16.mxu0 0
    %768 = vmatpush1.bf16.msra.mxu0 %v753
    %769 = vmatprep.subr.bf16.mxu0 0
    %770 = vmatpush1.bf16.msra.mxu0 %v754
    %771 = vmatprep.subr.bf16.mxu0 0
    %772 = vmatpush1.bf16.msra.mxu0 0
    %773 = vmatprep.subr.bf16.mxu0 0
    %774 = vmatpush1.bf16.msra.mxu0 0
    %775 = vmatprep.subr.bf16.mxu0 0
    %776 = vmatpush1.bf16.msra.mxu0 0
    %777 = vmatprep.subr.bf16.mxu0 0
    %778 = vmatpush1.bf16.msra.mxu0 0
    %779 = vmatprep.subr.bf16.mxu0 0
    %780 = vmatpush1.bf16.msra.mxu0 0
    %781 = vmatprep.subr.bf16.mxu0 0
    %782 = vmatpush1.bf16.msra.mxu0 0
    %783 = vmatprep.subr.bf16.mxu0 0
    %784 = vmatpush1.bf16.msra.mxu0 0
    %785 = vmatprep.subr.bf16.mxu0 0
    %786 = vmatpush1.bf16.msra.mxu0 0
    %787 = vmatprep.subr.bf16.mxu0 0
    %788 = vmatpush1.bf16.msra.mxu0 0
    %789 = vmatprep.subr.bf16.mxu0 0
    %790 = vmatpush1.bf16.msra.mxu0 0
    %791 = vmatprep.subr.bf16.mxu0 0
    %792 = vmatpush1.bf16.msra.mxu0 0
    %793 = vmatprep.subr.bf16.mxu0 0
    %794 = vmatpush1.bf16.msra.mxu0 0
    %795 = vmatprep.mubr.bf16.mxu0 0
    %796 = vmatmul.mubr.bf16.gmra.mrb[0].mxu0 %v761
    %v797 = vpop.f32.mrb[0].mxu0
    %v798 = vadd.f32 %v733, %v797
    %v799 = vpop.f32.mrb[0].mxu0
    %v800 = vpop.f32.mrb[0].mxu0
    %v801 = vpop.f32.mrb[0].mxu0
    %802 = vdwg.mxu0
    %803 = vst.msk [vmem:[#allocation7] sm:$0xff] %vm277, %v798
    // Predicated region
    $region30: #{tpu_custom_call.1} parent=1 // pred_check
      _
    $region31: #{tpu_custom_call.1} parent=1 // pred_check_branch
      %805 = sbr.rel (0) target = $region33
    $region32: #{tpu_custom_call.1} parent=1 // pred_region
      %s807 = ssub.s32 128, 128
      %808 = vsyncadd [#allocation4], %s807
      %s810 = sshll.u32 [#allocation7], 4
      %s811 = int_to_ptr.vmem [resolvable:$true] %s810
      %813 = dma.vmem_to_hbm [thread:$0]  %s811, 128, %s5, [#allocation4]
    $region33: #{tpu_custom_call.1} parent=1 // pred_fallthru
      _
    // Predicated region
    $region34: #{tpu_custom_call.1} parent=1 // pred_check
      _
    $region35: #{tpu_custom_call.1} parent=1 // pred_check_branch
      %815 = sbr.rel (0) target = $region37
    $region36: #{tpu_custom_call.1} parent=1 // pred_region
      %816 = dma.done [#allocation4], 128
    $region37: #{tpu_custom_call.1} parent=1 // pred_fallthru
      _
    %817 = vsyncpa [#allocation3], 1
    %818 = vsyncpa [#allocation6], 1
    %819 = vsyncpa [#allocation4], 1

</llo_original>
